<compile_context>
chip_gen: v6e
topology: v6e:2x2x1
jax: 0.10.0
libtpu: 0.0.40
codegen_flags: <defaults>
</compile_context>

<pallas_src>
import jax
import jax.numpy as jnp
from jax import lax
from jax.experimental import pallas as pl
from jax.experimental.pallas import tpu as pltpu

CHUNK = 4  # timesteps per grid step, statically unrolled inside the kernel body


def lstm_chunk_kernel(max_len_ref, gx_ref, whh_ref, len_ref, h_out_ref, h_sc, c_sc):
    """One time-chunk of the LSTM recurrence.

    max_len_ref: SMEM (1,) int32   scalar-prefetch: max(lengths)
    gx_ref:      (CHUNK, B, 4H) f32  precomputed x@W_ih + bias for this chunk
    whh_ref:     (H, 4H) f32         hidden->gates weights (transposed)
    len_ref:     (B, 1) int32        valid sequence lengths (0 for padded rows)
    h_out_ref:   (B, H) f32          final hidden state (written on last chunk)
    h_sc, c_sc:  (B, H) f32 scratch  recurrent state, persists across grid steps
    """
    ci = pl.program_id(0)
    B, H = h_out_ref.shape

    @pl.when(ci == 0)
    def _():
        h_sc[...] = jnp.zeros_like(h_sc)
        c_sc[...] = jnp.zeros_like(c_sc)

    base = ci * CHUNK
    max_len = max_len_ref[0]

    # Skip whole chunks once every sequence has ended.
    @pl.when(base < max_len)
    def _():
        whh = whh_ref[...]
        lens = len_ref[...]          # (B, 1) int32
        h = h_sc[...]
        c = c_sc[...]
        for u in range(CHUNK):       # static unroll within the chunk
            t = base + u
            gates = gx_ref[u] + jnp.dot(h, whh,
                                        preferred_element_type=jnp.float32)
            # Full-width (B, 4H=128-lane) activations, then lane-slice per gate
            # (gate order i, f, g, o — PyTorch convention).
            sig = jax.nn.sigmoid(gates)
            tnh = jnp.tanh(gates)
            i_g = sig[:, 0 * H:1 * H]
            f_g = sig[:, 1 * H:2 * H]
            g_g = tnh[:, 2 * H:3 * H]
            o_g = sig[:, 3 * H:4 * H]
            c_new = f_g * c + i_g * g_g
            h_new = o_g * jnp.tanh(c_new)
            # Packed-sequence masking: only update while t < length_b.
            valid = t < lens                     # (B, 1) bool, broadcasts over H
            h = jnp.where(valid, h_new, h)
            c = jnp.where(valid, c_new, c)
        h_sc[...] = h
        c_sc[...] = c

    @pl.when(ci == pl.num_programs(0) - 1)
    def _():
        h_out_ref[...] = h_sc[...]


def time_series_encoder(x, lengths, w_ih, w_hh, b_ih, b_hh):
    """Forward pass equivalent to TimeSeriesEncoder.forward(x, lengths).

    x:       (B, T, D) float32, batch-first padded sequences
    lengths: (B,)      int32, valid lengths (>= 1)
    w_ih:    (4H, D), w_hh: (4H, H), b_ih/b_hh: (4H,)  (PyTorch LSTM params)
    returns: ht.squeeze()  -> (B, H) for B > 1, (H,) for B == 1
    """
    B, T, D = x.shape
    H = w_hh.shape[1]
    G = 4 * H

    # Pad batch to the 8-sublane vreg height; pad time to a multiple of CHUNK.
    B_pad = max(8, -(-B // 8) * 8)
    T_pad = -(-T // CHUNK) * CHUNK

    x = x.astype(jnp.float32)
    wih_t = jnp.transpose(w_ih).astype(jnp.float32)    # (D, 4H)
    whh_t = jnp.transpose(w_hh).astype(jnp.float32)    # (H, 4H)
    bias = (b_ih + b_hh).astype(jnp.float32)           # (4H,)

    # Hoisted input projection: one big MXU-filling matmul, emitted directly in
    # time-major (T, B, 4H) layout with the bias folded in once.
    gates_x = jnp.einsum("btd,dg->tbg", x, wih_t,
                         preferred_element_type=jnp.float32) + bias
    gates_x = jnp.pad(gates_x, ((0, T_pad - T), (0, B_pad - B), (0, 0)))

    lens = jnp.zeros((B_pad, 1), jnp.int32).at[:B, 0].set(
        lengths.astype(jnp.int32))
    max_len = jnp.max(lengths.astype(jnp.int32)).reshape(1)

    n_chunks = T_pad // CHUNK

    # TODO(synk): for very large B on v7x, add a leading batch-tile grid axis
    # marked "parallel" so the two TensorCores each process half the batch.
    h = pl.pallas_call(
        lstm_chunk_kernel,
        out_shape=jax.ShapeDtypeStruct((B_pad, H), jnp.float32),
        grid_spec=pltpu.PrefetchScalarGridSpec(
            num_scalar_prefetch=1,
            grid=(n_chunks,),
            in_specs=[
                pl.BlockSpec((CHUNK, B_pad, G), lambda c, ml: (c, 0, 0)),  # gates_x
                pl.BlockSpec((H, G), lambda c, ml: (0, 0)),                # whh
                pl.BlockSpec((B_pad, 1), lambda c, ml: (0, 0)),            # lengths
            ],
            out_specs=pl.BlockSpec((B_pad, H), lambda c, ml: (0, 0)),
            scratch_shapes=[pltpu.VMEM((B_pad, H), jnp.float32),           # h
                            pltpu.VMEM((B_pad, H), jnp.float32)],          # c
        ),
        compiler_params=pltpu.CompilerParams(
            dimension_semantics=("arbitrary",),       # serial recurrence
            vmem_limit_bytes=32 * 1024 * 1024,
        ),
    )(max_len, gates_x, whh_t, lens)

    h = h[:B]
    # ht from PyTorch has shape (1, B, H); .squeeze() drops all size-1 dims.
    return jnp.squeeze(h[None])


def _reference_lstm(x, lengths, w_ih, w_hh, b_ih, b_hh):
    """Pure-JAX reference (lax.scan) for correctness checking."""
    B, T, D = x.shape
    H = w_hh.shape[1]
    bias = b_ih + b_hh

    def step(carry, inp):
        h, c = carry
        x_t, t = inp
        gates = x_t @ w_ih.T + h @ w_hh.T + bias
        i_g = jax.nn.sigmoid(gates[:, 0 * H:1 * H])
        f_g = jax.nn.sigmoid(gates[:, 1 * H:2 * H])
        g_g = jnp.tanh(gates[:, 2 * H:3 * H])
        o_g = jax.nn.sigmoid(gates[:, 3 * H:4 * H])
        c_new = f_g * c + i_g * g_g
        h_new = o_g * jnp.tanh(c_new)
        valid = (t < lengths)[:, None]
        h = jnp.where(valid, h_new, h)
        c = jnp.where(valid, c_new, c)
        return (h, c), None

    h0 = jnp.zeros((B, H), jnp.float32)
    c0 = jnp.zeros((B, H), jnp.float32)
    (h, _), _ = lax.scan(step, (h0, c0),
                         (jnp.transpose(x, (1, 0, 2)), jnp.arange(T)))
    return h


if __name__ == "__main__":
    # Small shapes consistent with the module: batch=4, seq=8, input_dim=16,
    # projection_dim (hidden) = 32.
    B, T, D, H = 4, 8, 16, 32

    key = jax.random.PRNGKey(0)
    k_x, k_wih, k_whh, k_bih, k_bhh = jax.random.split(key, 5)

    x = jax.random.normal(k_x, (B, T, D), dtype=jnp.float32)
    lengths = jnp.array([8, 5, 3, 6], dtype=jnp.int32)

    # PyTorch LSTM default init: U(-1/sqrt(H), 1/sqrt(H)), deterministic here.
    k_scale = 1.0 / jnp.sqrt(jnp.float32(H))
    w_ih = jax.random.uniform(k_wih, (4 * H, D), jnp.float32, -k_scale, k_scale)
    w_hh = jax.random.uniform(k_whh, (4 * H, H), jnp.float32, -k_scale, k_scale)
    b_ih = jax.random.uniform(k_bih, (4 * H,), jnp.float32, -k_scale, k_scale)
    b_hh = jax.random.uniform(k_bhh, (4 * H,), jnp.float32, -k_scale, k_scale)

    out = time_series_encoder(x, lengths, w_ih, w_hh, b_ih, b_hh)
    out = jax.block_until_ready(out)

    ref = _reference_lstm(x, lengths, w_ih, w_hh, b_ih, b_hh)
    assert out.shape == (B, H), out.shape
    assert jnp.allclose(out, ref, atol=1e-5, rtol=1e-5), "mismatch vs reference"

    print("KERNEL_OK")
</pallas_src>

<mosaic_0001>
module attributes {stable_mosaic.version = 11 : i64} {
  func.func @lstm_chunk_kernel(%arg0: i32, %arg1: memref<1xi32, #tpu.memory_space<smem>>, %arg2: memref<4x8x128xf32, #tpu.memory_space<vmem>>, %arg3: memref<32x128xf32, #tpu.memory_space<vmem>>, %arg4: memref<8x1xi32, #tpu.memory_space<vmem>>, %arg5: memref<8x32xf32, #tpu.memory_space<vmem>>, %arg6: memref<8x32xf32, #tpu.memory_space<vmem>>, %arg7: memref<8x32xf32, #tpu.memory_space<vmem>>) attributes {dimension_semantics = [#tpu.dimension_semantics<arbitrary>], iteration_bounds = array<i64: 2>, scalar_prefetch = 1 : i64, scratch_operands = 2 : i64, tpu.core_type = #tpu.core_type<tc>, window_params = [{transform_indices = @transform_0, window_bounds = array<i64: 4, 8, 128>}, {pipeline_mode = #tpu.pipeline_mode<synchronous>, transform_indices = @transform_1, window_bounds = array<i64: 32, 128>}, {pipeline_mode = #tpu.pipeline_mode<synchronous>, transform_indices = @transform_2, window_bounds = array<i64: 8, 1>}, {pipeline_mode = #tpu.pipeline_mode<synchronous>, transform_indices = @transform_3, window_bounds = array<i64: 8, 32>}]} {
    %c0_i32 = arith.constant 0 : i32
    %0 = arith.cmpi eq, %arg0, %c0_i32 : i32
    %1 = arith.extui %0 : i1 to i32
    %c0_i32_0 = arith.constant 0 : i32
    %2 = arith.cmpi ne, %1, %c0_i32_0 : i32
    scf.if %2 {
      %cst = arith.constant 0.000000e+00 : f32
      %11 = vector.broadcast %cst : f32 to vector<8x32xf32>
      %c0_3 = arith.constant 0 : index
      %c0_4 = arith.constant 0 : index
      %12 = vector.load %arg6[%c0_3, %c0_4] : memref<8x32xf32, #tpu.memory_space<vmem>>, vector<8x32xf32>
      tpu.vector_store %arg6[%c0_3, %c0_4], %11 {strides = array<i32>} : memref<8x32xf32, #tpu.memory_space<vmem>>, vector<8x32xf32>,
      %cst_5 = arith.constant 0.000000e+00 : f32
      %13 = vector.broadcast %cst_5 : f32 to vector<8x32xf32>
      %c0_6 = arith.constant 0 : index
      %c0_7 = arith.constant 0 : index
      %14 = vector.load %arg7[%c0_6, %c0_7] : memref<8x32xf32, #tpu.memory_space<vmem>>, vector<8x32xf32>
      tpu.vector_store %arg7[%c0_6, %c0_7], %13 {strides = array<i32>} : memref<8x32xf32, #tpu.memory_space<vmem>>, vector<8x32xf32>,
    } else {
    }
    %c4_i32 = arith.constant 4 : i32
    %3 = arith.muli %arg0, %c4_i32 : i32
    %c0 = arith.constant 0 : index
    %4 = memref.load %arg1[%c0] : memref<1xi32, #tpu.memory_space<smem>>
    %5 = arith.cmpi slt, %3, %4 : i32
    %6 = arith.extui %5 : i1 to i32
    %c0_i32_1 = arith.constant 0 : i32
    %7 = arith.cmpi ne, %6, %c0_i32_1 : i32
    scf.if %7 {
      %c0_3 = arith.constant 0 : index
      %c0_4 = arith.constant 0 : index
      %11 = vector.load %arg3[%c0_3, %c0_4] : memref<32x128xf32, #tpu.memory_space<vmem>>, vector<32x128xf32>
      %c0_5 = arith.constant 0 : index
      %c0_6 = arith.constant 0 : index
      %12 = vector.load %arg4[%c0_5, %c0_6] : memref<8x1xi32, #tpu.memory_space<vmem>>, vector<8x1xi32>
      %c0_7 = arith.constant 0 : index
      %c0_8 = arith.constant 0 : index
      %13 = vector.load %arg6[%c0_7, %c0_8] : memref<8x32xf32, #tpu.memory_space<vmem>>, vector<8x32xf32>
      %c0_9 = arith.constant 0 : index
      %c0_10 = arith.constant 0 : index
      %14 = vector.load %arg7[%c0_9, %c0_10] : memref<8x32xf32, #tpu.memory_space<vmem>>, vector<8x32xf32>
      %c0_i32_11 = arith.constant 0 : i32
      %15 = arith.addi %3, %c0_i32_11 : i32
      %c0_12 = arith.constant 0 : index
      %c0_13 = arith.constant 0 : index
      %c0_14 = arith.constant 0 : index
      %16 = vector.load %arg2[%c0_12, %c0_13, %c0_14] : memref<4x8x128xf32, #tpu.memory_space<vmem>>, vector<1x8x128xf32>
      %17 = vector.shape_cast %16 : vector<1x8x128xf32> to vector<8x128xf32>
      %cst = arith.constant dense<0.000000e+00> : vector<8x128xf32>
      %18 = tpu.matmul %13, %11, %cst {dimension_numbers = #tpu.dot_dimension_numbers<[1], [0], [0], [1], [0, 0, 1, 1], [], []>} : vector<8x32xf32>, vector<32x128xf32>, vector<8x128xf32> -> vector<8x128xf32>
      %19 = arith.addf %17, %18 : vector<8x128xf32>
      %20 = arith.negf %19 : vector<8x128xf32>
      %21 = math.exp %20 : vector<8x128xf32>
      %cst_15 = arith.constant 1.000000e+00 : f32
      %22 = vector.broadcast %cst_15 : f32 to vector<8x128xf32>
      %23 = arith.addf %22, %21 : vector<8x128xf32>
      %24 = arith.divf %22, %23 : vector<8x128xf32>
      %25 = math.tanh %19 : vector<8x128xf32>
      %26 = vector.extract_strided_slice %24 {offsets = [0, 0], sizes = [8, 32], strides = [1, 1]} : vector<8x128xf32> to vector<8x32xf32>
      %27 = vector.extract_strided_slice %24 {offsets = [0, 32], sizes = [8, 32], strides = [1, 1]} : vector<8x128xf32> to vector<8x32xf32>
      %28 = vector.extract_strided_slice %25 {offsets = [0, 64], sizes = [8, 32], strides = [1, 1]} : vector<8x128xf32> to vector<8x32xf32>
      %29 = vector.extract_strided_slice %24 {offsets = [0, 96], sizes = [8, 32], strides = [1, 1]} : vector<8x128xf32> to vector<8x32xf32>
      %30 = arith.mulf %27, %14 : vector<8x32xf32>
      %31 = arith.mulf %26, %28 : vector<8x32xf32>
      %32 = arith.addf %30, %31 : vector<8x32xf32>
      %33 = math.tanh %32 : vector<8x32xf32>
      %34 = arith.mulf %29, %33 : vector<8x32xf32>
      %35 = vector.broadcast %15 : i32 to vector<8x1xi32>
      %36 = arith.cmpi slt, %35, %12 : vector<8x1xi32>
      %37 = vector.shape_cast %36 : vector<8x1xi1> to vector<8x1xi1>
      %38 = vector.broadcast %37 : vector<8x1xi1> to vector<8x32xi1>
      %39 = arith.select %38, %34, %13 : vector<8x32xi1>, vector<8x32xf32>
      %40 = vector.shape_cast %36 : vector<8x1xi1> to vector<8x1xi1>
      %41 = vector.broadcast %40 : vector<8x1xi1> to vector<8x32xi1>
      %42 = arith.select %41, %32, %14 : vector<8x32xi1>, vector<8x32xf32>
      %c1_i32_16 = arith.constant 1 : i32
      %43 = arith.addi %3, %c1_i32_16 : i32
      %c1 = arith.constant 1 : index
      %c0_17 = arith.constant 0 : index
      %c0_18 = arith.constant 0 : index
      %44 = vector.load %arg2[%c1, %c0_17, %c0_18] : memref<4x8x128xf32, #tpu.memory_space<vmem>>, vector<1x8x128xf32>
      %45 = vector.shape_cast %44 : vector<1x8x128xf32> to vector<8x128xf32>
      %cst_19 = arith.constant dense<0.000000e+00> : vector<8x128xf32>
      %46 = tpu.matmul %39, %11, %cst_19 {dimension_numbers = #tpu.dot_dimension_numbers<[1], [0], [0], [1], [0, 0, 1, 1], [], []>} : vector<8x32xf32>, vector<32x128xf32>, vector<8x128xf32> -> vector<8x128xf32>
      %47 = arith.addf %45, %46 : vector<8x128xf32>
      %48 = arith.negf %47 : vector<8x128xf32>
      %49 = math.exp %48 : vector<8x128xf32>
      %cst_20 = arith.constant 1.000000e+00 : f32
      %50 = vector.broadcast %cst_20 : f32 to vector<8x128xf32>
      %51 = arith.addf %50, %49 : vector<8x128xf32>
      %52 = arith.divf %50, %51 : vector<8x128xf32>
      %53 = math.tanh %47 : vector<8x128xf32>
      %54 = vector.extract_strided_slice %52 {offsets = [0, 0], sizes = [8, 32], strides = [1, 1]} : vector<8x128xf32> to vector<8x32xf32>
      %55 = vector.extract_strided_slice %52 {offsets = [0, 32], sizes = [8, 32], strides = [1, 1]} : vector<8x128xf32> to vector<8x32xf32>
      %56 = vector.extract_strided_slice %53 {offsets = [0, 64], sizes = [8, 32], strides = [1, 1]} : vector<8x128xf32> to vector<8x32xf32>
      %57 = vector.extract_strided_slice %52 {offsets = [0, 96], sizes = [8, 32], strides = [1, 1]} : vector<8x128xf32> to vector<8x32xf32>
      %58 = arith.mulf %55, %42 : vector<8x32xf32>
      %59 = arith.mulf %54, %56 : vector<8x32xf32>
      %60 = arith.addf %58, %59 : vector<8x32xf32>
      %61 = math.tanh %60 : vector<8x32xf32>
      %62 = arith.mulf %57, %61 : vector<8x32xf32>
      %63 = vector.broadcast %43 : i32 to vector<8x1xi32>
      %64 = arith.cmpi slt, %63, %12 : vector<8x1xi32>
      %65 = vector.shape_cast %64 : vector<8x1xi1> to vector<8x1xi1>
      %66 = vector.broadcast %65 : vector<8x1xi1> to vector<8x32xi1>
      %67 = arith.select %66, %62, %39 : vector<8x32xi1>, vector<8x32xf32>
      %68 = vector.shape_cast %64 : vector<8x1xi1> to vector<8x1xi1>
      %69 = vector.broadcast %68 : vector<8x1xi1> to vector<8x32xi1>
      %70 = arith.select %69, %60, %42 : vector<8x32xi1>, vector<8x32xf32>
      %c2_i32 = arith.constant 2 : i32
      %71 = arith.addi %3, %c2_i32 : i32
      %c2 = arith.constant 2 : index
      %c0_21 = arith.constant 0 : index
      %c0_22 = arith.constant 0 : index
      %72 = vector.load %arg2[%c2, %c0_21, %c0_22] : memref<4x8x128xf32, #tpu.memory_space<vmem>>, vector<1x8x128xf32>
      %73 = vector.shape_cast %72 : vector<1x8x128xf32> to vector<8x128xf32>
      %cst_23 = arith.constant dense<0.000000e+00> : vector<8x128xf32>
      %74 = tpu.matmul %67, %11, %cst_23 {dimension_numbers = #tpu.dot_dimension_numbers<[1], [0], [0], [1], [0, 0, 1, 1], [], []>} : vector<8x32xf32>, vector<32x128xf32>, vector<8x128xf32> -> vector<8x128xf32>
      %75 = arith.addf %73, %74 : vector<8x128xf32>
      %76 = arith.negf %75 : vector<8x128xf32>
      %77 = math.exp %76 : vector<8x128xf32>
      %cst_24 = arith.constant 1.000000e+00 : f32
      %78 = vector.broadcast %cst_24 : f32 to vector<8x128xf32>
      %79 = arith.addf %78, %77 : vector<8x128xf32>
      %80 = arith.divf %78, %79 : vector<8x128xf32>
      %81 = math.tanh %75 : vector<8x128xf32>
      %82 = vector.extract_strided_slice %80 {offsets = [0, 0], sizes = [8, 32], strides = [1, 1]} : vector<8x128xf32> to vector<8x32xf32>
      %83 = vector.extract_strided_slice %80 {offsets = [0, 32], sizes = [8, 32], strides = [1, 1]} : vector<8x128xf32> to vector<8x32xf32>
      %84 = vector.extract_strided_slice %81 {offsets = [0, 64], sizes = [8, 32], strides = [1, 1]} : vector<8x128xf32> to vector<8x32xf32>
      %85 = vector.extract_strided_slice %80 {offsets = [0, 96], sizes = [8, 32], strides = [1, 1]} : vector<8x128xf32> to vector<8x32xf32>
      %86 = arith.mulf %83, %70 : vector<8x32xf32>
      %87 = arith.mulf %82, %84 : vector<8x32xf32>
      %88 = arith.addf %86, %87 : vector<8x32xf32>
      %89 = math.tanh %88 : vector<8x32xf32>
      %90 = arith.mulf %85, %89 : vector<8x32xf32>
      %91 = vector.broadcast %71 : i32 to vector<8x1xi32>
      %92 = arith.cmpi slt, %91, %12 : vector<8x1xi32>
      %93 = vector.shape_cast %92 : vector<8x1xi1> to vector<8x1xi1>
      %94 = vector.broadcast %93 : vector<8x1xi1> to vector<8x32xi1>
      %95 = arith.select %94, %90, %67 : vector<8x32xi1>, vector<8x32xf32>
      %96 = vector.shape_cast %92 : vector<8x1xi1> to vector<8x1xi1>
      %97 = vector.broadcast %96 : vector<8x1xi1> to vector<8x32xi1>
      %98 = arith.select %97, %88, %70 : vector<8x32xi1>, vector<8x32xf32>
      %c3_i32 = arith.constant 3 : i32
      %99 = arith.addi %3, %c3_i32 : i32
      %c3 = arith.constant 3 : index
      %c0_25 = arith.constant 0 : index
      %c0_26 = arith.constant 0 : index
      %100 = vector.load %arg2[%c3, %c0_25, %c0_26] : memref<4x8x128xf32, #tpu.memory_space<vmem>>, vector<1x8x128xf32>
      %101 = vector.shape_cast %100 : vector<1x8x128xf32> to vector<8x128xf32>
      %cst_27 = arith.constant dense<0.000000e+00> : vector<8x128xf32>
      %102 = tpu.matmul %95, %11, %cst_27 {dimension_numbers = #tpu.dot_dimension_numbers<[1], [0], [0], [1], [0, 0, 1, 1], [], []>} : vector<8x32xf32>, vector<32x128xf32>, vector<8x128xf32> -> vector<8x128xf32>
      %103 = arith.addf %101, %102 : vector<8x128xf32>
      %104 = arith.negf %103 : vector<8x128xf32>
      %105 = math.exp %104 : vector<8x128xf32>
      %cst_28 = arith.constant 1.000000e+00 : f32
      %106 = vector.broadcast %cst_28 : f32 to vector<8x128xf32>
      %107 = arith.addf %106, %105 : vector<8x128xf32>
      %108 = arith.divf %106, %107 : vector<8x128xf32>
      %109 = math.tanh %103 : vector<8x128xf32>
      %110 = vector.extract_strided_slice %108 {offsets = [0, 0], sizes = [8, 32], strides = [1, 1]} : vector<8x128xf32> to vector<8x32xf32>
      %111 = vector.extract_strided_slice %108 {offsets = [0, 32], sizes = [8, 32], strides = [1, 1]} : vector<8x128xf32> to vector<8x32xf32>
      %112 = vector.extract_strided_slice %109 {offsets = [0, 64], sizes = [8, 32], strides = [1, 1]} : vector<8x128xf32> to vector<8x32xf32>
      %113 = vector.extract_strided_slice %108 {offsets = [0, 96], sizes = [8, 32], strides = [1, 1]} : vector<8x128xf32> to vector<8x32xf32>
      %114 = arith.mulf %111, %98 : vector<8x32xf32>
      %115 = arith.mulf %110, %112 : vector<8x32xf32>
      %116 = arith.addf %114, %115 : vector<8x32xf32>
      %117 = math.tanh %116 : vector<8x32xf32>
      %118 = arith.mulf %113, %117 : vector<8x32xf32>
      %119 = vector.broadcast %99 : i32 to vector<8x1xi32>
      %120 = arith.cmpi slt, %119, %12 : vector<8x1xi32>
      %121 = vector.shape_cast %120 : vector<8x1xi1> to vector<8x1xi1>
      %122 = vector.broadcast %121 : vector<8x1xi1> to vector<8x32xi1>
      %123 = arith.select %122, %118, %95 : vector<8x32xi1>, vector<8x32xf32>
      %124 = vector.shape_cast %120 : vector<8x1xi1> to vector<8x1xi1>
      %125 = vector.broadcast %124 : vector<8x1xi1> to vector<8x32xi1>
      %126 = arith.select %125, %116, %98 : vector<8x32xi1>, vector<8x32xf32>
      %c0_29 = arith.constant 0 : index
      %c0_30 = arith.constant 0 : index
      %127 = vector.load %arg6[%c0_29, %c0_30] : memref<8x32xf32, #tpu.memory_space<vmem>>, vector<8x32xf32>
      tpu.vector_store %arg6[%c0_29, %c0_30], %123 {strides = array<i32>} : memref<8x32xf32, #tpu.memory_space<vmem>>, vector<8x32xf32>,
      %c0_31 = arith.constant 0 : index
      %c0_32 = arith.constant 0 : index
      %128 = vector.load %arg7[%c0_31, %c0_32] : memref<8x32xf32, #tpu.memory_space<vmem>>, vector<8x32xf32>
      tpu.vector_store %arg7[%c0_31, %c0_32], %126 {strides = array<i32>} : memref<8x32xf32, #tpu.memory_space<vmem>>, vector<8x32xf32>,
    } else {
    }
    %c1_i32 = arith.constant 1 : i32
    %8 = arith.cmpi eq, %arg0, %c1_i32 : i32
    %9 = arith.extui %8 : i1 to i32
    %c0_i32_2 = arith.constant 0 : i32
    %10 = arith.cmpi ne, %9, %c0_i32_2 : i32
    scf.if %10 {
      %c0_3 = arith.constant 0 : index
      %c0_4 = arith.constant 0 : index
      %11 = vector.load %arg6[%c0_3, %c0_4] : memref<8x32xf32, #tpu.memory_space<vmem>>, vector<8x32xf32>
      %c0_5 = arith.constant 0 : index
      %c0_6 = arith.constant 0 : index
      %12 = vector.load %arg5[%c0_5, %c0_6] : memref<8x32xf32, #tpu.memory_space<vmem>>, vector<8x32xf32>
      tpu.vector_store %arg5[%c0_5, %c0_6], %11 {strides = array<i32>} : memref<8x32xf32, #tpu.memory_space<vmem>>, vector<8x32xf32>,
    } else {
    }
    return
  }
  func.func @transform_0(%arg0: i32, %arg1: memref<1xi32, #tpu.memory_space<smem>>) -> (i32, i32, i32) {
    %c0_i32 = arith.constant 0 : i32
    %c0_i32_0 = arith.constant 0 : i32
    %c0_i32_1 = arith.constant 0 : i32
    return %arg0, %c0_i32, %c0_i32_0 : i32, i32, i32
  }
  func.func @transform_1(%arg0: i32, %arg1: memref<1xi32, #tpu.memory_space<smem>>) -> (i32, i32) {
    %c0_i32 = arith.constant 0 : i32
    %c0_i32_0 = arith.constant 0 : i32
    %c0_i32_1 = arith.constant 0 : i32
    return %c0_i32, %c0_i32_0 : i32, i32
  }
  func.func @transform_2(%arg0: i32, %arg1: memref<1xi32, #tpu.memory_space<smem>>) -> (i32, i32) {
    %c0_i32 = arith.constant 0 : i32
    %c0_i32_0 = arith.constant 0 : i32
    %c0_i32_1 = arith.constant 0 : i32
    return %c0_i32, %c0_i32_0 : i32, i32
  }
  func.func @transform_3(%arg0: i32, %arg1: memref<1xi32, #tpu.memory_space<smem>>) -> (i32, i32) {
    %c0_i32 = arith.constant 0 : i32
    %c0_i32_0 = arith.constant 0 : i32
    %c0_i32_1 = arith.constant 0 : i32
    return %c0_i32, %c0_i32_0 : i32, i32
  }
}

</mosaic_0001>

<llo_original>
// kernel: tpu_custom_call.1
$region0: #{tpu_custom_call.1}
  #allocation0 [shape = 'u32[]', space=smem, size = 0x4, offset = 0x4, fixed_abs, tag = 'smem constant byte address 0x4 - core index']
  #allocation1 [shape = 'u32[144,128]{1,0:T(1,128)}', space=vmem, size = 0x12000, scoped, tag = 'internal scratch']
  #allocation2 [shape = 'f32[8,32]{1,0:T(8,128)}', space=vmem, size = 0x1000, scoped, tag = 'scratch operand']
  #allocation3 [shape = 'f32[8,32]{1,0:T(8,128)}', space=vmem, size = 0x1000, scoped, tag = 'scratch operand']
  #allocation4 [shape = 's32[1]{0}', space=sflag, size = 0x4, scoped, tag = 'scoped memory for tpu_custom_call.1']
  #allocation5 [shape = 's32[1]{0:T(128)S(6)}', space=smem, size = 0x200, scoped, tag = 'prefetched SMEM operand 0']
  %s0 = inlined_call_operand.<no memory space> [shape: s32[1], index: 0, kind: input, shape index: {}]
  %s1 = inlined_call_operand.hbm [shape: f32[8,8,128], index: 1, kind: input, shape index: {}]
  %s2 = inlined_call_operand.hbm [shape: f32[32,128], index: 2, kind: input, shape index: {}]
  %s3 = inlined_call_operand.vmem [shape: s32[8,1], index: 3, kind: input, shape index: {}]
  %s4 = inlined_call_operand.hbm [shape: f32[8,32], index: 4, kind: output, shape index: {}]
  %s5 = sld [smem:[#allocation0]]
  $region65: #{tpu_custom_call.1} parent=0
    _
  %s7 = ssub.s32 1, %s5
  %s8 = scalar_select 0, %s7, %s5
  %9 = sst [smem:[#allocation5]] %s0
  $region1: #{tpu_custom_call.1} parent=0
    #allocation6 [shape = 'u8[32768]{0}', space=vmem, size = 0x8000, scoped, tag = 'input window, operand 1']
    #allocation7 [shape = 's32[2]{0}', space=sflag, size = 0x8, scoped, tag = 'scoped memory for tpu_custom_call.1']
    #allocation8 [shape = 's32[2]{0}', space=sflag, size = 0x8, scoped, tag = 'scoped memory for tpu_custom_call.1']
    #allocation9 [shape = 'u8[16384]{0}', space=vmem, size = 0x4000, scoped, tag = 'input window, operand 2, single buffered']
    #allocation10 [shape = 's32[1]{0}', space=sflag, size = 0x4, scoped, tag = 'scoped memory for tpu_custom_call.1']
    #allocation11 [shape = 'u8[4096]{0}', space=vmem, size = 0x1000, scoped, tag = 'output window, operand 0, single buffered']
    %10 = vsyncpa [#allocation7], 0
    %s11 = scalar_lea.sflag [#allocation7], 1
    %12 = vsyncpa %s11, 0
    %13 = vsyncpa [#allocation10], 0
    %14 = vsyncpa [#allocation8], 0
    loop: start=0, step=1, limit=4
    $region2: #{tpu_custom_call.1} parent=1 // loop_pre_header
      _
    $region3: #{tpu_custom_call.1} parent=1 // loop_header
      %s16 = sphi 0, %s20
      %p17 = scmp.ge.s32.totalorder %s16, 4
      %s26 = sphi 0, %s28
      %s29 = sphi 0, %s26
      %s30 = sphi 0, %s29
      %s46 = sphi 0, %s30
      %s50 = sphi 0, %s50
      %s52 = sphi 0, %s50
      %s53 = sphi 0, %s52
      %s67 = sphi 0, %s53
      %s71 = sphi 0, %s71
      %s73 = sphi 0, %s71
      %s74 = sphi 0, %s73
      %s88 = sphi 0, %s74
      %s92 = sphi 0, %s92
      %s94 = sphi 0, %s92
      %s95 = sphi 0, %s94
      %s109 = sphi 0, %s95
    $region4: #{tpu_custom_call.1} parent=1 // loop_header_branch
      %19 = sbr.rel (%p17) target = $region8
    $region5: #{tpu_custom_call.1} parent=1 // loop_body
      %s21 = ssub.s32 %s16, 1
      %s22 = ssub.s32 %s16, 2
      %s23 = sadd.s32 %s16, 1
      %s24 = ssub.s32 %s16, %s23
      %p25 = scmp.eq.s32.totalorder %s24, 0
      %s27 = sadd.s32 %s26, 1
      %s28 = scalar_select %p25, %s26, %s27
      %p31 = pneg %p25
      %p32 = scmp.eq.s32.totalorder %s16, 1
      %p33 = por %p31, %p32
      %p34 = scmp.ne.s32.totalorder %s26, %s29
      %p35 = scmp.eq.s32.totalorder %s16, 0
      %p36 = por %p34, %p35
      %p37 = scmp.ne.s32.totalorder %s26, %s29
      %p38 = scmp.eq.s32.totalorder %s21, 1
      %p39 = por %p37, %p38
      %p40 = scmp.ne.s32.totalorder %s29, %s30
      %p41 = scmp.eq.s32.totalorder %s21, 0
      %p42 = por %p40, %p41
      %p43 = scmp.ne.s32.totalorder %s29, %s30
      %p44 = scmp.eq.s32.totalorder %s22, 1
      %p45 = por %p43, %p44
      %p47 = scmp.ne.s32.totalorder %s30, %s46
      %p48 = scmp.eq.s32.totalorder %s22, 0
      %p49 = por %p47, %p48
      %s51 = sadd.s32 %s50, 1
      %p54 = scmp.eq.s32.totalorder %s16, 1
      %p55 = scmp.ne.s32.totalorder %s50, %s52
      %p56 = scmp.eq.s32.totalorder %s16, 0
      %p57 = por %p55, %p56
      %p58 = scmp.ne.s32.totalorder %s50, %s52
      %p59 = scmp.eq.s32.totalorder %s21, 1
      %p60 = por %p58, %p59
      %p61 = scmp.ne.s32.totalorder %s52, %s53
      %p62 = scmp.eq.s32.totalorder %s21, 0
      %p63 = por %p61, %p62
      %p64 = scmp.ne.s32.totalorder %s52, %s53
      %p65 = scmp.eq.s32.totalorder %s22, 1
      %p66 = por %p64, %p65
      %p68 = scmp.ne.s32.totalorder %s53, %s67
      %p69 = scmp.eq.s32.totalorder %s22, 0
      %p70 = por %p68, %p69
      %s72 = sadd.s32 %s71, 1
      %p75 = scmp.eq.s32.totalorder %s16, 1
      %p76 = scmp.ne.s32.totalorder %s71, %s73
      %p77 = scmp.eq.s32.totalorder %s16, 0
      %p78 = por %p76, %p77
      %p79 = scmp.ne.s32.totalorder %s71, %s73
      %p80 = scmp.eq.s32.totalorder %s21, 1
      %p81 = por %p79, %p80
      %p82 = scmp.ne.s32.totalorder %s73, %s74
      %p83 = scmp.eq.s32.totalorder %s21, 0
      %p84 = por %p82, %p83
      %p85 = scmp.ne.s32.totalorder %s73, %s74
      %p86 = scmp.eq.s32.totalorder %s22, 1
      %p87 = por %p85, %p86
      %p89 = scmp.ne.s32.totalorder %s74, %s88
      %p90 = scmp.eq.s32.totalorder %s22, 0
      %p91 = por %p89, %p90
      %s93 = sadd.s32 %s92, 1
      %p96 = scmp.eq.s32.totalorder %s16, 1
      %p97 = scmp.ne.s32.totalorder %s92, %s94
      %p98 = scmp.eq.s32.totalorder %s16, 0
      %p99 = por %p97, %p98
      %p100 = scmp.ne.s32.totalorder %s92, %s94
      %p101 = scmp.eq.s32.totalorder %s21, 1
      %p102 = por %p100, %p101
      %p103 = scmp.ne.s32.totalorder %s94, %s95
      %p104 = scmp.eq.s32.totalorder %s21, 0
      %p105 = por %p103, %p104
      %p106 = scmp.ne.s32.totalorder %s94, %s95
      %p107 = scmp.eq.s32.totalorder %s22, 1
      %p108 = por %p106, %p107
      %p110 = scmp.ne.s32.totalorder %s95, %s109
      %p111 = scmp.eq.s32.totalorder %s22, 0
      %p112 = por %p110, %p111
      %p113 = scmp.le.s32.totalorder 1, %s16
      %p114 = scmp.lt.s32.totalorder %s16, 3
      %p115 = pnand %p113, %p114
      %p116 = pneg %p115
      // Predicated region
      $region9: #{tpu_custom_call.1} parent=5 // pred_check
        _
      $region10: #{tpu_custom_call.1} parent=5 // pred_check_branch
        %118 = sbr.rel (%p115) target = $region12
      $region11: #{tpu_custom_call.1} parent=5 // pred_region
        %s119 = ssub.s32 %s16, 1
        // Predicated region
        $region13: #{tpu_custom_call.1} parent=11 // pred_check
          %p120 = pneg %p63
        $region14: #{tpu_custom_call.1} parent=11 // pred_check_branch
          %122 = sbr.rel (%p120) target = $region16
        $region15: #{tpu_custom_call.1} parent=11 // pred_region
          %s124 = ssub.s32 512, 512
          %125 = vsyncadd [#allocation10], %s124
          %s126 = sshll.u32 [#allocation9], 4
          %s127 = int_to_ptr.vmem [resolvable:$true] %s126
          %132 = dma.hbm_to_vmem [thread:$0]  %s2, 512, %s127, [#allocation10], 128, 128, 8
        $region16: #{tpu_custom_call.1} parent=11 // pred_fallthru
          _
        // Predicated region
        $region17: #{tpu_custom_call.1} parent=11 // pred_check
          %p133 = pneg %p84
        $region18: #{tpu_custom_call.1} parent=11 // pred_check_branch
          %135 = sbr.rel (%p133) target = $region20
        $region19: #{tpu_custom_call.1} parent=11 // pred_region
          _
        $region20: #{tpu_custom_call.1} parent=11 // pred_fallthru
          _
      $region12: #{tpu_custom_call.1} parent=5 // pred_fallthru
        _
      %p136 = scmp.lt.s32.totalorder %s16, 2
      // Predicated region
      $region21: #{tpu_custom_call.1} parent=5 // pred_check
        %p137 = pneg %p136
      $region22: #{tpu_custom_call.1} parent=5 // pred_check_branch
        %139 = sbr.rel (%p137) target = $region24
      $region23: #{tpu_custom_call.1} parent=5 // pred_region
        // Predicated region
        $region25: #{tpu_custom_call.1} parent=23 // pred_check
          %p140 = pneg %p36
        $region26: #{tpu_custom_call.1} parent=23 // pred_check_branch
          %142 = sbr.rel (%p140) target = $region28
        $region27: #{tpu_custom_call.1} parent=23 // pred_region
          %s143 = sand.u32 %s26, 1
          %s144 = scalar_lea.sflag [#allocation7], %s143
          %s145 = sand.u32 %s26, 1
          %s146 = smul.addr %s145, 32
          %s147 = scalar_lea.vmem [#allocation6], %s146
          %s148 = smul.u32 4, %s16
          %s150 = ssub.s32 512, 512
          %151 = vsyncadd %s144, %s150
          %s152 = smul.addr %s148, 128
          %s153 = scalar_lea.hbm %s1, %s152
          %s154 = sshll.u32 %s147, 4
          %s155 = int_to_ptr.vmem [resolvable:$true] %s154
          %160 = dma.hbm_to_vmem [thread:$0]  %s153, 512, %s155, %s144, 128, 128, 8
        $region28: #{tpu_custom_call.1} parent=23 // pred_fallthru
          _
      $region24: #{tpu_custom_call.1} parent=5 // pred_fallthru
        _
      %p161 = scmp.le.s32.totalorder 1, %s16
      %p162 = scmp.lt.s32.totalorder %s16, 3
      %p163 = pnand %p161, %p162
      %p164 = pneg %p163
      // Predicated region
      $region29: #{tpu_custom_call.1} parent=5 // pred_check
        _
      $region30: #{tpu_custom_call.1} parent=5 // pred_check_branch
        %166 = sbr.rel (%p163) target = $region32
      $region31: #{tpu_custom_call.1} parent=5 // pred_region
        %s167 = ssub.s32 %s16, 1
        %s168 = sand.u32 %s29, 1
        %s169 = scalar_lea.sflag [#allocation7], %s168
        %s170 = sand.u32 %s29, 1
        %s171 = smul.addr %s170, 32
        %s172 = scalar_lea.vmem [#allocation6], %s171
        // Predicated region
        $region33: #{tpu_custom_call.1} parent=31 // pred_check
          %p173 = pneg %p42
        $region34: #{tpu_custom_call.1} parent=31 // pred_check_branch
          %175 = sbr.rel (%p173) target = $region36
        $region35: #{tpu_custom_call.1} parent=31 // pred_region
          %176 = dma.done %s169, 512
        $region36: #{tpu_custom_call.1} parent=31 // pred_fallthru
          _
        // Predicated region
        $region37: #{tpu_custom_call.1} parent=31 // pred_check
          %p177 = pneg %p63
        $region38: #{tpu_custom_call.1} parent=31 // pred_check_branch
          %179 = sbr.rel (%p177) target = $region40
        $region39: #{tpu_custom_call.1} parent=31 // pred_region
          %180 = dma.done [#allocation10], 512
        $region40: #{tpu_custom_call.1} parent=31 // pred_fallthru
          _
        %s181 = sand.u32 %s29, 1
        %s182 = scalar_lea.sflag [#allocation7], %s181
        %s183 = sand.u32 %s29, 1
        %s184 = smul.addr %s183, 32
        %s185 = scalar_lea.vmem [#allocation6], %s184
        %p186 = pneg %p42
        %p187 = pneg %p39
        %p188 = pneg %p63
        %p189 = pneg %p60
        %p190 = pneg %p84
        %p191 = pneg %p81
        %p192 = pneg %p105
        %p193 = pneg %p102
        %s194 = smul.u32 4, %s21
        %p195 = scmp.eq.s32.totalorder %s21, 0
        // Predicated region
        $region41: #{tpu_custom_call.1} parent=31 // pred_check
          %p196 = pneg %p195
        $region42: #{tpu_custom_call.1} parent=31 // pred_check_branch
          %198 = sbr.rel (%p196) target = $region44
        $region43: #{tpu_custom_call.1} parent=31 // pred_region
          %vm199 = vcmask 261120
          %200 = vst.msk [vmem:[#allocation2] sm:$0xff] %vm199, 0.0
          %201 = vst.msk [vmem:[#allocation3] sm:$0xff] %vm199, 0.0
        $region44: #{tpu_custom_call.1} parent=31 // pred_fallthru
          _
        %s202 = smul.u32 %s21, 4
        %s203 = sld [smem:[#allocation5]]
        %p204 = scmp.lt.s32.totalorder %s202, %s203
        // Predicated region
        $region45: #{tpu_custom_call.1} parent=31 // pred_check
          %p205 = pneg %p204
        $region46: #{tpu_custom_call.1} parent=31 // pred_check_branch
          %207 = sbr.rel (%p205) target = $region48
        $region47: #{tpu_custom_call.1} parent=31 // pred_region
          %v208 = vld [vmem:[#allocation9] sm:$0xff]
          %v209 = vld [vmem:[#allocation9 + $0x8] sm:$0xff]
          %v210 = vld [vmem:[#allocation9 + $0x10] sm:$0xff]
          %v211 = vld [vmem:[#allocation9 + $0x18] sm:$0xff]
          %v212 = vld [vmem:[%s3] sm:$0xff]
          %v213 = vld [vmem:[#allocation2] sm:$0xff]
          %v214 = vld [vmem:[#allocation3] sm:$0xff]
          %v215 = vld [vmem:[%s172] sm:$0xff]
          %vm216 = vcmask 261120
          %v218 = vsel %vm216, %v213, 0
          %220 = vmatprep.subr.mxu0 0.0
          %221 = vmatpush1.msra.mxu0 0.0
          %222 = vmatprep.subr.mxu0 0.0
          %223 = vmatpush1.msra.mxu0 0.0
          %224 = vmatprep.subr.mxu0 0.0
          %225 = vmatpush1.msra.mxu0 0.0
          %226 = vmatprep.subr.mxu0 0.0
          %227 = vmatpush1.msra.mxu0 0.0
          %228 = vmatprep.subr.mxu0 0.0
          %229 = vmatpush1.msra.mxu0 0.0
          %230 = vmatprep.subr.mxu0 0.0
          %231 = vmatpush1.msra.mxu0 0.0
          %232 = vmatprep.subr.mxu0 0.0
          %233 = vmatpush1.msra.mxu0 0.0
          %234 = vmatprep.subr.mxu0 0.0
          %235 = vmatpush1.msra.mxu0 0.0
          %236 = vmatprep.subr.mxu0 0.0
          %237 = vmatpush1.msra.mxu0 0.0
          %238 = vmatprep.subr.mxu0 0.0
          %239 = vmatpush1.msra.mxu0 0.0
          %240 = vmatprep.subr.mxu0 0.0
          %241 = vmatpush1.msra.mxu0 0.0
          %242 = vmatprep.subr.mxu0 0.0
          %243 = vmatpush1.msra.mxu0 0.0
          %244 = vmatprep.subr.mxu0 0.0
          %245 = vmatpush1.msra.mxu0 %v211
          %246 = vmatprep.subr.mxu0 0.0
          %247 = vmatpush1.msra.mxu0 %v210
          %248 = vmatprep.subr.mxu0 0.0
          %249 = vmatpush1.msra.mxu0 %v209
          %250 = vmatprep.subr.mxu0 0.0
          %251 = vmatpush1.msra.mxu0 %v208
          %252 = vmatprep.subr.mxu0 0.0
          %253 = vmatpush2.msra.mxu0 0.0
          %254 = vmatprep.subr.mxu0 0.0
          %255 = vmatpush2.msra.mxu0 0.0
          %256 = vmatprep.subr.mxu0 0.0
          %257 = vmatpush2.msra.mxu0 0.0
          %258 = vmatprep.subr.mxu0 0.0
          %259 = vmatpush2.msra.mxu0 0.0
          %260 = vmatprep.subr.mxu0 0.0
          %261 = vmatpush2.msra.mxu0 0.0
          %262 = vmatprep.subr.mxu0 0.0
          %263 = vmatpush2.msra.mxu0 0.0
          %264 = vmatprep.subr.mxu0 0.0
          %265 = vmatpush2.msra.mxu0 0.0
          %266 = vmatprep.subr.mxu0 0.0
          %267 = vmatpush2.msra.mxu0 0.0
          %268 = vmatprep.subr.mxu0 0.0
          %269 = vmatpush2.msra.mxu0 0.0
          %270 = vmatprep.subr.mxu0 0.0
          %271 = vmatpush2.msra.mxu0 0.0
          %272 = vmatprep.subr.mxu0 0.0
          %273 = vmatpush2.msra.mxu0 0.0
          %274 = vmatprep.subr.mxu0 0.0
          %275 = vmatpush2.msra.mxu0 0.0
          %276 = vmatprep.subr.mxu0 0.0
          %277 = vmatpush2.msra.mxu0 0.0
          %278 = vmatprep.subr.mxu0 0.0
          %279 = vmatpush2.msra.mxu0 0.0
          %280 = vmatprep.subr.mxu0 0.0
          %281 = vmatpush2.msra.mxu0 0.0
          %282 = vmatprep.subr.mxu0 0.0
          %283 = vmatpush2.msra.mxu0 0.0
          %284 = vmatprep.mubr.f32.mxu0 0.0
          %285 = vmatmul.mubr.f32.gmra.mxu0 %v218
          %v286 = vpop.f32.mrf.mxu0
          %v287 = vadd.f32 0.0, %v286
          %v288 = vpop.f32.mrf.mxu0
          %289 = vdwg.mxu0
          %v290 = vadd.f32 %v215, %v287
          %v291 = vxor.u32 %v290, 2147483648
          %v292 = vmul.f32 %v291, 1.442695
          %v293 = vpow.pop %v292
          %v294 = vadd.f32 %v293, 1.0
          %v295 = vrcp.pop %v294
          %v296 = vmul.f32 1.0, %v295
          %v297 = vtanh.pop %v290
          %299 = vrot.lane.b32.xlu0 %v214, 32
          %v300 = vpop.permute.xlu0 %299
          %v302 = vmul.f32 %v296, %v300
          %304 = vrot.lane.b32.xlu0 %v297, 64
          %v305 = vpop.permute.xlu0 %304
          %v307 = vmul.f32 %v296, %v305
          %309 = vrot.lane.b32.xlu0 %v307, 32
          %v310 = vpop.permute.xlu0 %309
          %v312 = vadd.f32 %v302, %v310
          %v313 = vtanh.pop %v312
          %315 = vrot.lane.b32.xlu0 %v313, 64
          %v316 = vpop.permute.xlu0 %315
          %v318 = vmul.f32 %v296, %v316
          %v319 = vstv %s202
          %vm320 = vcmp.lt.s32.totalorder %v319, %v212
          %v321 = vsel %vm320, 1, 0
          %322 = vset.pattern.permute.xlu0 0
          %323 = vperm.xlu0 %322, %v321
          %v324 = vpop.permute.xlu0 %323
          %vm325 = vcmp.eq.s32.totalorder %v324, 1
          %326 = vrot.lane.b32.xlu0 %v213, 96
          %v327 = vpop.permute.xlu0 %326
          %v329 = vsel %vm325, %v318, %v327
          %v330 = vsel %vm325, %v312, %v300
          %s331 = sadd.s32 %s202, 1
          %s332 = scalar_lea.vmem %s172, 8 [#allocation6]
          %v333 = vld [vmem:[%s332] sm:$0xff]
          %335 = vrot.lane.b32.xlu0 %v329, 32
          %v336 = vpop.permute.xlu0 %335
          %v337 = vsel %vm216, %v336, 0
          %339 = vmatprep.subr.mxu0 0.0
          %340 = vmatpush1.msra.mxu0 0.0
          %341 = vmatprep.subr.mxu0 0.0
          %342 = vmatpush1.msra.mxu0 0.0
          %343 = vmatprep.subr.mxu0 0.0
          %344 = vmatpush1.msra.mxu0 0.0
          %345 = vmatprep.subr.mxu0 0.0
          %346 = vmatpush1.msra.mxu0 0.0
          %347 = vmatprep.subr.mxu0 0.0
          %348 = vmatpush1.msra.mxu0 0.0
          %349 = vmatprep.subr.mxu0 0.0
          %350 = vmatpush1.msra.mxu0 0.0
          %351 = vmatprep.subr.mxu0 0.0
          %352 = vmatpush1.msra.mxu0 0.0
          %353 = vmatprep.subr.mxu0 0.0
          %354 = vmatpush1.msra.mxu0 0.0
          %355 = vmatprep.subr.mxu0 0.0
          %356 = vmatpush1.msra.mxu0 0.0
          %357 = vmatprep.subr.mxu0 0.0
          %358 = vmatpush1.msra.mxu0 0.0
          %359 = vmatprep.subr.mxu0 0.0
          %360 = vmatpush1.msra.mxu0 0.0
          %361 = vmatprep.subr.mxu0 0.0
          %362 = vmatpush1.msra.mxu0 0.0
          %363 = vmatprep.subr.mxu0 0.0
          %364 = vmatpush1.msra.mxu0 %v211
          %365 = vmatprep.subr.mxu0 0.0
          %366 = vmatpush1.msra.mxu0 %v210
          %367 = vmatprep.subr.mxu0 0.0
          %368 = vmatpush1.msra.mxu0 %v209
          %369 = vmatprep.subr.mxu0 0.0
          %370 = vmatpush1.msra.mxu0 %v208
          %371 = vmatprep.subr.mxu0 0.0
          %372 = vmatpush2.msra.mxu0 0.0
          %373 = vmatprep.subr.mxu0 0.0
          %374 = vmatpush2.msra.mxu0 0.0
          %375 = vmatprep.subr.mxu0 0.0
          %376 = vmatpush2.msra.mxu0 0.0
          %377 = vmatprep.subr.mxu0 0.0
          %378 = vmatpush2.msra.mxu0 0.0
          %379 = vmatprep.subr.mxu0 0.0
          %380 = vmatpush2.msra.mxu0 0.0
          %381 = vmatprep.subr.mxu0 0.0
          %382 = vmatpush2.msra.mxu0 0.0
          %383 = vmatprep.subr.mxu0 0.0
          %384 = vmatpush2.msra.mxu0 0.0
          %385 = vmatprep.subr.mxu0 0.0
          %386 = vmatpush2.msra.mxu0 0.0
          %387 = vmatprep.subr.mxu0 0.0
          %388 = vmatpush2.msra.mxu0 0.0
          %389 = vmatprep.subr.mxu0 0.0
          %390 = vmatpush2.msra.mxu0 0.0
          %391 = vmatprep.subr.mxu0 0.0
          %392 = vmatpush2.msra.mxu0 0.0
          %393 = vmatprep.subr.mxu0 0.0
          %394 = vmatpush2.msra.mxu0 0.0
          %395 = vmatprep.subr.mxu0 0.0
          %396 = vmatpush2.msra.mxu0 0.0
          %397 = vmatprep.subr.mxu0 0.0
          %398 = vmatpush2.msra.mxu0 0.0
          %399 = vmatprep.subr.mxu0 0.0
          %400 = vmatpush2.msra.mxu0 0.0
          %401 = vmatprep.subr.mxu0 0.0
          %402 = vmatpush2.msra.mxu0 0.0
          %403 = vmatprep.mubr.f32.mxu0 0.0
          %404 = vmatmul.mubr.f32.gmra.mxu0 %v337
          %v405 = vpop.f32.mrf.mxu0
          %v406 = vadd.f32 0.0, %v405
          %v407 = vpop.f32.mrf.mxu0
          %408 = vdwg.mxu0
          %v409 = vadd.f32 %v333, %v406
          %v410 = vxor.u32 %v409, 2147483648
          %v411 = vmul.f32 %v410, 1.442695
          %v412 = vpow.pop %v411
          %v413 = vadd.f32 %v412, 1.0
          %v414 = vrcp.pop %v413
          %v415 = vmul.f32 1.0, %v414
          %v416 = vtanh.pop %v409
          %v417 = vmul.f32 %v415, %v330
          %419 = vrot.lane.b32.xlu0 %v416, 64
          %v420 = vpop.permute.xlu0 %419
          %v422 = vmul.f32 %v415, %v420
          %424 = vrot.lane.b32.xlu0 %v422, 32
          %v425 = vpop.permute.xlu0 %424
          %v427 = vadd.f32 %v417, %v425
          %v428 = vtanh.pop %v427
          %430 = vrot.lane.b32.xlu0 %v428, 64
          %v431 = vpop.permute.xlu0 %430
          %v433 = vmul.f32 %v415, %v431
          %v434 = vstv %s331
          %vm435 = vcmp.lt.s32.totalorder %v434, %v212
          %v436 = vsel %vm435, 1, 0
          %437 = vset.pattern.permute.xlu0 0
          %438 = vperm.xlu0 %437, %v436
          %v439 = vpop.permute.xlu0 %438
          %vm440 = vcmp.eq.s32.totalorder %v439, 1
          %v441 = vsel %vm440, %v433, %v329
          %v442 = vsel %vm440, %v427, %v330
          %s443 = sadd.s32 %s202, 2
          %s444 = scalar_lea.vmem %s172, 16 [#allocation6]
          %v445 = vld [vmem:[%s444] sm:$0xff]
          %447 = vrot.lane.b32.xlu0 %v441, 32
          %v448 = vpop.permute.xlu0 %447
          %v449 = vsel %vm216, %v448, 0
          %451 = vmatprep.subr.mxu0 0.0
          %452 = vmatpush1.msra.mxu0 0.0
          %453 = vmatprep.subr.mxu0 0.0
          %454 = vmatpush1.msra.mxu0 0.0
          %455 = vmatprep.subr.mxu0 0.0
          %456 = vmatpush1.msra.mxu0 0.0
          %457 = vmatprep.subr.mxu0 0.0
          %458 = vmatpush1.msra.mxu0 0.0
          %459 = vmatprep.subr.mxu0 0.0
          %460 = vmatpush1.msra.mxu0 0.0
          %461 = vmatprep.subr.mxu0 0.0
          %462 = vmatpush1.msra.mxu0 0.0
          %463 = vmatprep.subr.mxu0 0.0
          %464 = vmatpush1.msra.mxu0 0.0
          %465 = vmatprep.subr.mxu0 0.0
          %466 = vmatpush1.msra.mxu0 0.0
          %467 = vmatprep.subr.mxu0 0.0
          %468 = vmatpush1.msra.mxu0 0.0
          %469 = vmatprep.subr.mxu0 0.0
          %470 = vmatpush1.msra.mxu0 0.0
          %471 = vmatprep.subr.mxu0 0.0
          %472 = vmatpush1.msra.mxu0 0.0
          %473 = vmatprep.subr.mxu0 0.0
          %474 = vmatpush1.msra.mxu0 0.0
          %475 = vmatprep.subr.mxu0 0.0
          %476 = vmatpush1.msra.mxu0 %v211
          %477 = vmatprep.subr.mxu0 0.0
          %478 = vmatpush1.msra.mxu0 %v210
          %479 = vmatprep.subr.mxu0 0.0
          %480 = vmatpush1.msra.mxu0 %v209
          %481 = vmatprep.subr.mxu0 0.0
          %482 = vmatpush1.msra.mxu0 %v208
          %483 = vmatprep.subr.mxu0 0.0
          %484 = vmatpush2.msra.mxu0 0.0
          %485 = vmatprep.subr.mxu0 0.0
          %486 = vmatpush2.msra.mxu0 0.0
          %487 = vmatprep.subr.mxu0 0.0
          %488 = vmatpush2.msra.mxu0 0.0
          %489 = vmatprep.subr.mxu0 0.0
          %490 = vmatpush2.msra.mxu0 0.0
          %491 = vmatprep.subr.mxu0 0.0
          %492 = vmatpush2.msra.mxu0 0.0
          %493 = vmatprep.subr.mxu0 0.0
          %494 = vmatpush2.msra.mxu0 0.0
          %495 = vmatprep.subr.mxu0 0.0
          %496 = vmatpush2.msra.mxu0 0.0
          %497 = vmatprep.subr.mxu0 0.0
          %498 = vmatpush2.msra.mxu0 0.0
          %499 = vmatprep.subr.mxu0 0.0
          %500 = vmatpush2.msra.mxu0 0.0
          %501 = vmatprep.subr.mxu0 0.0
          %502 = vmatpush2.msra.mxu0 0.0
          %503 = vmatprep.subr.mxu0 0.0
          %504 = vmatpush2.msra.mxu0 0.0
          %505 = vmatprep.subr.mxu0 0.0
          %506 = vmatpush2.msra.mxu0 0.0
          %507 = vmatprep.subr.mxu0 0.0
          %508 = vmatpush2.msra.mxu0 0.0
          %509 = vmatprep.subr.mxu0 0.0
          %510 = vmatpush2.msra.mxu0 0.0
          %511 = vmatprep.subr.mxu0 0.0
          %512 = vmatpush2.msra.mxu0 0.0
          %513 = vmatprep.subr.mxu0 0.0
          %514 = vmatpush2.msra.mxu0 0.0
          %515 = vmatprep.mubr.f32.mxu0 0.0
          %516 = vmatmul.mubr.f32.gmra.mxu0 %v449
          %v517 = vpop.f32.mrf.mxu0
          %v518 = vadd.f32 0.0, %v517
          %v519 = vpop.f32.mrf.mxu0
          %520 = vdwg.mxu0
          %v521 = vadd.f32 %v445, %v518
          %v522 = vxor.u32 %v521, 2147483648
          %v523 = vmul.f32 %v522, 1.442695
          %v524 = vpow.pop %v523
          %v525 = vadd.f32 %v524, 1.0
          %v526 = vrcp.pop %v525
          %v527 = vmul.f32 1.0, %v526
          %v528 = vtanh.pop %v521
          %v529 = vmul.f32 %v527, %v442
          %531 = vrot.lane.b32.xlu0 %v528, 64
          %v532 = vpop.permute.xlu0 %531
          %v534 = vmul.f32 %v527, %v532
          %536 = vrot.lane.b32.xlu0 %v534, 32
          %v537 = vpop.permute.xlu0 %536
          %v539 = vadd.f32 %v529, %v537
          %v540 = vtanh.pop %v539
          %542 = vrot.lane.b32.xlu0 %v540, 64
          %v543 = vpop.permute.xlu0 %542
          %v545 = vmul.f32 %v527, %v543
          %v546 = vstv %s443
          %vm547 = vcmp.lt.s32.totalorder %v546, %v212
          %v548 = vsel %vm547, 1, 0
          %549 = vset.pattern.permute.xlu0 0
          %550 = vperm.xlu0 %549, %v548
          %v551 = vpop.permute.xlu0 %550
          %vm552 = vcmp.eq.s32.totalorder %v551, 1
          %v553 = vsel %vm552, %v545, %v441
          %v554 = vsel %vm552, %v539, %v442
          %s555 = sadd.s32 %s202, 3
          %s556 = scalar_lea.vmem %s172, 24 [#allocation6]
          %v557 = vld [vmem:[%s556] sm:$0xff]
          %559 = vrot.lane.b32.xlu0 %v553, 32
          %v560 = vpop.permute.xlu0 %559
          %v561 = vsel %vm216, %v560, 0
          %563 = vmatprep.subr.mxu0 0.0
          %564 = vmatpush1.msra.mxu0 0.0
          %565 = vmatprep.subr.mxu0 0.0
          %566 = vmatpush1.msra.mxu0 0.0
          %567 = vmatprep.subr.mxu0 0.0
          %568 = vmatpush1.msra.mxu0 0.0
          %569 = vmatprep.subr.mxu0 0.0
          %570 = vmatpush1.msra.mxu0 0.0
          %571 = vmatprep.subr.mxu0 0.0
          %572 = vmatpush1.msra.mxu0 0.0
          %573 = vmatprep.subr.mxu0 0.0
          %574 = vmatpush1.msra.mxu0 0.0
          %575 = vmatprep.subr.mxu0 0.0
          %576 = vmatpush1.msra.mxu0 0.0
          %577 = vmatprep.subr.mxu0 0.0
          %578 = vmatpush1.msra.mxu0 0.0
          %579 = vmatprep.subr.mxu0 0.0
          %580 = vmatpush1.msra.mxu0 0.0
          %581 = vmatprep.subr.mxu0 0.0
          %582 = vmatpush1.msra.mxu0 0.0
          %583 = vmatprep.subr.mxu0 0.0
          %584 = vmatpush1.msra.mxu0 0.0
          %585 = vmatprep.subr.mxu0 0.0
          %586 = vmatpush1.msra.mxu0 0.0
          %587 = vmatprep.subr.mxu0 0.0
          %588 = vmatpush1.msra.mxu0 %v211
          %589 = vmatprep.subr.mxu0 0.0
          %590 = vmatpush1.msra.mxu0 %v210
          %591 = vmatprep.subr.mxu0 0.0
          %592 = vmatpush1.msra.mxu0 %v209
          %593 = vmatprep.subr.mxu0 0.0
          %594 = vmatpush1.msra.mxu0 %v208
          %595 = vmatprep.subr.mxu0 0.0
          %596 = vmatpush2.msra.mxu0 0.0
          %597 = vmatprep.subr.mxu0 0.0
          %598 = vmatpush2.msra.mxu0 0.0
          %599 = vmatprep.subr.mxu0 0.0
          %600 = vmatpush2.msra.mxu0 0.0
          %601 = vmatprep.subr.mxu0 0.0
          %602 = vmatpush2.msra.mxu0 0.0
          %603 = vmatprep.subr.mxu0 0.0
          %604 = vmatpush2.msra.mxu0 0.0
          %605 = vmatprep.subr.mxu0 0.0
          %606 = vmatpush2.msra.mxu0 0.0
          %607 = vmatprep.subr.mxu0 0.0
          %608 = vmatpush2.msra.mxu0 0.0
          %609 = vmatprep.subr.mxu0 0.0
          %610 = vmatpush2.msra.mxu0 0.0
          %611 = vmatprep.subr.mxu0 0.0
          %612 = vmatpush2.msra.mxu0 0.0
          %613 = vmatprep.subr.mxu0 0.0
          %614 = vmatpush2.msra.mxu0 0.0
          %615 = vmatprep.subr.mxu0 0.0
          %616 = vmatpush2.msra.mxu0 0.0
          %617 = vmatprep.subr.mxu0 0.0
          %618 = vmatpush2.msra.mxu0 0.0
          %619 = vmatprep.subr.mxu0 0.0
          %620 = vmatpush2.msra.mxu0 0.0
          %621 = vmatprep.subr.mxu0 0.0
          %622 = vmatpush2.msra.mxu0 0.0
          %623 = vmatprep.subr.mxu0 0.0
          %624 = vmatpush2.msra.mxu0 0.0
          %625 = vmatprep.subr.mxu0 0.0
          %626 = vmatpush2.msra.mxu0 0.0
          %627 = vmatprep.mubr.f32.mxu0 0.0
          %628 = vmatmul.mubr.f32.gmra.mxu0 %v561
          %v629 = vpop.f32.mrf.mxu0
          %v630 = vadd.f32 0.0, %v629
          %v631 = vpop.f32.mrf.mxu0
          %632 = vdwg.mxu0
          %v633 = vadd.f32 %v557, %v630
          %v634 = vxor.u32 %v633, 2147483648
          %v635 = vmul.f32 %v634, 1.442695
          %v636 = vpow.pop %v635
          %v637 = vadd.f32 %v636, 1.0
          %v638 = vrcp.pop %v637
          %v639 = vmul.f32 1.0, %v638
          %v640 = vtanh.pop %v633
          %v641 = vmul.f32 %v639, %v554
          %643 = vrot.lane.b32.xlu0 %v640, 64
          %v644 = vpop.permute.xlu0 %643
          %v646 = vmul.f32 %v639, %v644
          %648 = vrot.lane.b32.xlu0 %v646, 32
          %v649 = vpop.permute.xlu0 %648
          %v651 = vadd.f32 %v641, %v649
          %v652 = vtanh.pop %v651
          %654 = vrot.lane.b32.xlu0 %v652, 64
          %v655 = vpop.permute.xlu0 %654
          %v657 = vmul.f32 %v639, %v655
          %v658 = vstv %s555
          %vm659 = vcmp.lt.s32.totalorder %v658, %v212
          %v660 = vsel %vm659, 1, 0
          %661 = vset.pattern.permute.xlu0 0
          %662 = vperm.xlu0 %661, %v660
          %v663 = vpop.permute.xlu0 %662
          %vm664 = vcmp.eq.s32.totalorder %v663, 1
          %v665 = vsel %vm664, %v657, %v553
          %v666 = vsel %vm664, %v651, %v554
          %668 = vrot.lane.b32.xlu0 %v665, 32
          %v669 = vpop.permute.xlu0 %668
          %671 = vst.msk [vmem:[#allocation2] sm:$0xff] %vm216, %v669
          %673 = vrot.lane.b32.xlu0 %v666, 96
          %v674 = vpop.permute.xlu0 %673
          %676 = vst.msk [vmem:[#allocation3] sm:$0xff] %vm216, %v674
        $region48: #{tpu_custom_call.1} parent=31 // pred_fallthru
          _
        %p677 = scmp.eq.s32.totalorder %s21, 1
        // Predicated region
        $region49: #{tpu_custom_call.1} parent=31 // pred_check
          %p678 = pneg %p677
        $region50: #{tpu_custom_call.1} parent=31 // pred_check_branch
          %680 = sbr.rel (%p678) target = $region52
        $region51: #{tpu_custom_call.1} parent=31 // pred_region
          %v681 = vld [vmem:[#allocation2] sm:$0xff]
          %vm682 = vcmask 261120
          %683 = vst.msk [vmem:[#allocation11] sm:$0xff] %vm682, %v681
        $region52: #{tpu_custom_call.1} parent=31 // pred_fallthru
          _
        // Predicated region
        $region53: #{tpu_custom_call.1} parent=31 // pred_check
          %p684 = pneg %p102
        $region54: #{tpu_custom_call.1} parent=31 // pred_check_branch
          %686 = sbr.rel (%p684) target = $region56
        $region55: #{tpu_custom_call.1} parent=31 // pred_region
          %s688 = ssub.s32 128, 128
          %689 = vsyncadd [#allocation8], %s688
          %s691 = sshll.u32 [#allocation11], 4
          %s692 = int_to_ptr.vmem [resolvable:$true] %s691
          %694 = dma.vmem_to_hbm [thread:$0]  %s692, 128, %s4, [#allocation8]
        $region56: #{tpu_custom_call.1} parent=31 // pred_fallthru
          _
        // Predicated region
        $region57: #{tpu_custom_call.1} parent=31 // pred_check
          %p695 = pneg %p102
        $region58: #{tpu_custom_call.1} parent=31 // pred_check_branch
          %697 = sbr.rel (%p695) target = $region60
        $region59: #{tpu_custom_call.1} parent=31 // pred_region
          %698 = dma.done [#allocation8], 128
        $region60: #{tpu_custom_call.1} parent=31 // pred_fallthru
          _
      $region32: #{tpu_custom_call.1} parent=5 // pred_fallthru
        _
      %p699 = scmp.le.s32.totalorder 2, %s16
      // Predicated region
      $region61: #{tpu_custom_call.1} parent=5 // pred_check
        %p700 = pneg %p699
      $region62: #{tpu_custom_call.1} parent=5 // pred_check_branch
        %702 = sbr.rel (%p700) target = $region64
      $region63: #{tpu_custom_call.1} parent=5 // pred_region
        %s703 = ssub.s32 %s16, 2
      $region64: #{tpu_custom_call.1} parent=5 // pred_fallthru
        _
    $region6: #{tpu_custom_call.1} parent=1 // loop_footer
      %s20 = sadd.s32 1, %s16
    $region7: #{tpu_custom_call.1} parent=1 // loop_footer_branch
      %15 = sbr.rel target = $region3
    $region8: #{tpu_custom_call.1} parent=1 // loop_exit
      _
    %704 = vsyncpa [#allocation7], 1
    %s705 = scalar_lea.sflag [#allocation7], 1
    %706 = vsyncpa %s705, 1
    %707 = vsyncpa [#allocation10], 1
    %708 = vsyncpa [#allocation8], 1
    %s709 = scalar_lea.sflag [#allocation8], 1
    %710 = vsyncpa %s709, 1

</llo_original>
